<compile_context>
chip_gen: v7x
topology: tpu7x:2x2x1
jax: 0.10.0
libtpu: 0.0.40
codegen_flags: <defaults>
</compile_context>

<pallas_src>
import functools

import jax
import jax.numpy as jnp
import numpy as np
from jax import lax
from jax.experimental import pallas as pl
from jax.experimental.pallas import tpu as pltpu


def _pool_sum_matrix(n_in: int, kernel: int, stride: int, pad: int) -> np.ndarray:
    """0/1 matrix P (n_out, n_in) s.t. (P @ v) is the zero-padded window *sum* of v
    along one axis (the 1/k^2 averaging divisor cancels between num and den)."""
    n_out = (n_in + 2 * pad - kernel) // stride + 1          # ceil_mode=False
    m = np.zeros((n_out, n_in), np.float32)
    for o in range(n_out):
        start = o * stride - pad
        for k in range(kernel):
            i = start + k
            if 0 <= i < n_in:
                m[o, i] = 1.0
    return m


def _bf16_terms(v):
    """Split an f32 array into 3 bf16 terms whose sum reproduces it to ~2^-24 rel.

    Contracting these terms against the exactly-bf16 0/1 pooling operand is the
    per-operand-precision scheme from the review (data side pays the extra passes,
    pooling side is single-pass), expressed with plain bf16 MXU matmuls.
    """
    t0 = v.astype(jnp.bfloat16)
    r0 = v - t0.astype(jnp.float32)
    t1 = r0.astype(jnp.bfloat16)
    r1 = r0 - t1.astype(jnp.float32)
    t2 = r1.astype(jnp.bfloat16)
    return t0, t1, t2


@functools.partial(jax.jit, static_argnames=("kernel_size", "stride", "padding"))
def softpool2d_forward(x, kernel_size=3, stride=2, padding=1):
    B, C, H, W = x.shape
    pool_h = _pool_sum_matrix(H, kernel_size, stride, padding)   # (H_out, H)
    pool_w = _pool_sum_matrix(W, kernel_size, stride, padding)   # (W_out, W)
    H_out, W_out = pool_h.shape[0], pool_w.shape[0]

    # Channel-group size: cap the W-pool contraction (Cg*W) at one MXU tile (128).
    cg = max(1, min(C, 128 // max(W, 1)))
    while C % cg:
        cg -= 1
    G = C // cg
    gw, gwo = cg * W, cg * W_out

    # Small bf16 pooling operators (exact: entries are 0/1), DMA'd into VMEM once.
    pwt = jnp.asarray(np.kron(np.eye(cg, dtype=np.float32), pool_w).T,
                      dtype=jnp.bfloat16)                        # (cg*W, cg*W_out)
    ph = jnp.asarray(pool_h, dtype=jnp.bfloat16)                 # (H_out, H), no B-kron

    def kernel(x_ref, pwt_ref, ph_ref, out_ref):
        x_blk = x_ref[...]                                  # (H, C*W) f32, one sample
        e = jnp.exp(x_blk)                                  # EUP
        n = e * x_blk                                       # VPU

        # Fused num/den: stack along rows (multiples of 8 sublanes -> free),
        # then 3-term bf16 decomposition of the data operand.
        data = jnp.concatenate([n, e], axis=0)              # (2H, C*W) f32
        lhs = jnp.concatenate(_bf16_terms(data), axis=0)    # (6H, C*W) bf16

        pw = pwt_ref[...]                                   # (cg*W, cg*W_out) bf16
        nw_parts, ew_parts = [], []
        for g in range(G):                                  # static MXU-tile-sized dots
            yw = jnp.dot(lhs[:, g * gw:(g + 1) * gw], pw,
                         preferred_element_type=jnp.float32)     # (6H, cg*W_out)
            yw = yw[0:2 * H] + yw[2 * H:4 * H] + yw[4 * H:6 * H]  # recombine bf16 terms
            nw_parts.append(yw[0:H])                        # W-pooled exp(x)*x
            ew_parts.append(yw[H:2 * H])                    # W-pooled exp(x)

        # Lane layout: [ num lanes (C*W_out) | den lanes (C*W_out) ] -> 128-lane slab.
        pooled = jnp.concatenate(nw_parts + ew_parts, axis=1)          # (H, 2*C*W_out)
        rhs = jnp.concatenate(_bf16_terms(pooled), axis=1)             # (H, 6*C*W_out)

        yh = jnp.dot(ph_ref[...], rhs, preferred_element_type=jnp.float32)
        L = 2 * C * W_out
        yh = yh[:, 0:L] + yh[:, L:2 * L] + yh[:, 2 * L:3 * L]          # (H_out, 2*C*W_out)

        num = yh[:, 0:C * W_out]
        den = yh[:, C * W_out:]            # pooled sum of exp(x) > 0 for every window
        # approx=True would exceed the 1e-4 tolerance budget; keep the exact reciprocal.
        out_ref[...] = (num * pl.reciprocal(den, approx=False)).astype(out_ref.dtype)

    # Lane-dense presentation: (B, C, H, W) -> (B*H, C*W). Wrapper-side plumbing only.
    x2 = jnp.transpose(x, (0, 2, 1, 3)).reshape(B * H, C * W)

    out2 = pl.pallas_call(
        kernel,
        out_shape=jax.ShapeDtypeStruct((B * H_out, C * W_out), jnp.float32),
        grid=(B,),
        in_specs=[
            pl.BlockSpec((H, C * W), lambda b: (b, 0)),              # per-sample block
            pl.BlockSpec((cg * W, cg * W_out), lambda b: (0, 0)),    # constant, DMA once
            pl.BlockSpec((H_out, H), lambda b: (0, 0)),              # constant, DMA once
        ],
        out_specs=pl.BlockSpec((H_out, C * W_out), lambda b: (b, 0)),
        compiler_params=pltpu.CompilerParams(
            dimension_semantics=("parallel",)),                      # megacore over batch
    )(x2, pwt, ph)

    # (B*H_out, C*W_out) -> (B, C, H_out, W_out)
    return jnp.transpose(out2.reshape(B, H_out, C, W_out), (0, 2, 1, 3))


def softpool2d_reference(x, kernel_size=3, stride=2, padding=1):
    """Pure-JAX mirror of the PyTorch SoftPooling2D forward (count_include_pad=True)."""
    e = jnp.exp(x)
    win = (1, 1, kernel_size, kernel_size)
    strides = (1, 1, stride, stride)
    pad = ((0, 0), (0, 0), (padding, padding), (padding, padding))
    div = float(kernel_size * kernel_size)

    def avgpool(v):
        return lax.reduce_window(v, 0.0, lax.add, win, strides, pad) / div

    return avgpool(e * x) / avgpool(e)


if __name__ == "__main__":
    # SoftPooling2D(kernel_size=3, strides=2, padding=1) — small demo shapes.
    # C=16, W=16 -> two channel groups of 8 (Cg*W = 128 lanes per MXU-tile dot).
    B, C, H, W = 2, 16, 16, 16
    x = jax.random.normal(jax.random.PRNGKey(0), (B, C, H, W), jnp.float32)

    out = jax.block_until_ready(softpool2d_forward(x))
    ref = softpool2d_reference(x)

    assert out.shape == (B, C, H // 2, W // 2)
    np.testing.assert_allclose(np.asarray(out), np.asarray(ref), rtol=1e-4, atol=1e-5)

    print("KERNEL_OK")
</pallas_src>

<mosaic_0001>
module attributes {stable_mosaic.version = 11 : i64} {
  func.func @kernel(%arg0: i32, %arg1: memref<16x256xf32, #tpu.memory_space<vmem>>, %arg2: memref<128x64xbf16, #tpu.memory_space<vmem>>, %arg3: memref<8x16xbf16, #tpu.memory_space<vmem>>, %arg4: memref<8x128xf32, #tpu.memory_space<vmem>>) attributes {dimension_semantics = [#tpu.dimension_semantics<parallel>], iteration_bounds = array<i64: 2>, scalar_prefetch = 0 : i64, scratch_operands = 0 : i64, tpu.core_type = #tpu.core_type<tc>, window_params = [{transform_indices = @transform_0, window_bounds = array<i64: 16, 256>}, {pipeline_mode = #tpu.pipeline_mode<synchronous>, transform_indices = @transform_1, window_bounds = array<i64: 128, 64>}, {pipeline_mode = #tpu.pipeline_mode<synchronous>, transform_indices = @transform_2, window_bounds = array<i64: 8, 16>}, {transform_indices = @transform_3, window_bounds = array<i64: 8, 128>}]} {
    %c0 = arith.constant 0 : index
    %c0_0 = arith.constant 0 : index
    %0 = vector.load %arg1[%c0, %c0_0] : memref<16x256xf32, #tpu.memory_space<vmem>>, vector<16x256xf32>
    %1 = math.exp %0 : vector<16x256xf32>
    %2 = arith.mulf %1, %0 : vector<16x256xf32>
    %3 = tpu.concatenate %2, %1 in 0 : vector<16x256xf32>, vector<16x256xf32> -> vector<32x256xf32>
    %4 = arith.truncf %3 : vector<32x256xf32> to vector<32x256xbf16>
    %5 = arith.extf %4 : vector<32x256xbf16> to vector<32x256xf32>
    %6 = arith.subf %3, %5 : vector<32x256xf32>
    %7 = arith.truncf %6 : vector<32x256xf32> to vector<32x256xbf16>
    %8 = arith.extf %7 : vector<32x256xbf16> to vector<32x256xf32>
    %9 = arith.subf %6, %8 : vector<32x256xf32>
    %10 = arith.truncf %9 : vector<32x256xf32> to vector<32x256xbf16>
    %11 = tpu.concatenate %4, %7, %10 in 0 : vector<32x256xbf16>, vector<32x256xbf16>, vector<32x256xbf16> -> vector<96x256xbf16>
    %c0_1 = arith.constant 0 : index
    %c0_2 = arith.constant 0 : index
    %12 = vector.load %arg2[%c0_1, %c0_2] : memref<128x64xbf16, #tpu.memory_space<vmem>>, vector<128x64xbf16>
    %13 = vector.extract_strided_slice %11 {offsets = [0, 0], sizes = [96, 128], strides = [1, 1]} : vector<96x256xbf16> to vector<96x128xbf16>
    %cst = arith.constant dense<0.000000e+00> : vector<96x64xf32>
    %14 = tpu.matmul %13, %12, %cst {dimension_numbers = #tpu.dot_dimension_numbers<[1], [0], [0], [1], [0, 0, 1, 1], [], []>} : vector<96x128xbf16>, vector<128x64xbf16>, vector<96x64xf32> -> vector<96x64xf32>
    %15 = vector.extract_strided_slice %14 {offsets = [0, 0], sizes = [32, 64], strides = [1, 1]} : vector<96x64xf32> to vector<32x64xf32>
    %16 = vector.extract_strided_slice %14 {offsets = [32, 0], sizes = [32, 64], strides = [1, 1]} : vector<96x64xf32> to vector<32x64xf32>
    %17 = arith.addf %15, %16 : vector<32x64xf32>
    %18 = vector.extract_strided_slice %14 {offsets = [64, 0], sizes = [32, 64], strides = [1, 1]} : vector<96x64xf32> to vector<32x64xf32>
    %19 = arith.addf %17, %18 : vector<32x64xf32>
    %20 = vector.extract_strided_slice %19 {offsets = [0, 0], sizes = [16, 64], strides = [1, 1]} : vector<32x64xf32> to vector<16x64xf32>
    %21 = vector.extract_strided_slice %19 {offsets = [16, 0], sizes = [16, 64], strides = [1, 1]} : vector<32x64xf32> to vector<16x64xf32>
    %22 = vector.extract_strided_slice %11 {offsets = [0, 128], sizes = [96, 128], strides = [1, 1]} : vector<96x256xbf16> to vector<96x128xbf16>
    %cst_3 = arith.constant dense<0.000000e+00> : vector<96x64xf32>
    %23 = tpu.matmul %22, %12, %cst_3 {dimension_numbers = #tpu.dot_dimension_numbers<[1], [0], [0], [1], [0, 0, 1, 1], [], []>} : vector<96x128xbf16>, vector<128x64xbf16>, vector<96x64xf32> -> vector<96x64xf32>
    %24 = vector.extract_strided_slice %23 {offsets = [0, 0], sizes = [32, 64], strides = [1, 1]} : vector<96x64xf32> to vector<32x64xf32>
    %25 = vector.extract_strided_slice %23 {offsets = [32, 0], sizes = [32, 64], strides = [1, 1]} : vector<96x64xf32> to vector<32x64xf32>
    %26 = arith.addf %24, %25 : vector<32x64xf32>
    %27 = vector.extract_strided_slice %23 {offsets = [64, 0], sizes = [32, 64], strides = [1, 1]} : vector<96x64xf32> to vector<32x64xf32>
    %28 = arith.addf %26, %27 : vector<32x64xf32>
    %29 = vector.extract_strided_slice %28 {offsets = [0, 0], sizes = [16, 64], strides = [1, 1]} : vector<32x64xf32> to vector<16x64xf32>
    %30 = vector.extract_strided_slice %28 {offsets = [16, 0], sizes = [16, 64], strides = [1, 1]} : vector<32x64xf32> to vector<16x64xf32>
    %31 = tpu.concatenate %20, %29, %21, %30 in 1 : vector<16x64xf32>, vector<16x64xf32>, vector<16x64xf32>, vector<16x64xf32> -> vector<16x256xf32>
    %32 = arith.truncf %31 : vector<16x256xf32> to vector<16x256xbf16>
    %33 = arith.extf %32 : vector<16x256xbf16> to vector<16x256xf32>
    %34 = arith.subf %31, %33 : vector<16x256xf32>
    %35 = arith.truncf %34 : vector<16x256xf32> to vector<16x256xbf16>
    %36 = arith.extf %35 : vector<16x256xbf16> to vector<16x256xf32>
    %37 = arith.subf %34, %36 : vector<16x256xf32>
    %38 = arith.truncf %37 : vector<16x256xf32> to vector<16x256xbf16>
    %39 = tpu.concatenate %32, %35, %38 in 1 : vector<16x256xbf16>, vector<16x256xbf16>, vector<16x256xbf16> -> vector<16x768xbf16>
    %c0_4 = arith.constant 0 : index
    %c0_5 = arith.constant 0 : index
    %40 = vector.load %arg3[%c0_4, %c0_5] : memref<8x16xbf16, #tpu.memory_space<vmem>>, vector<8x16xbf16>
    %cst_6 = arith.constant dense<0.000000e+00> : vector<8x768xf32>
    %41 = tpu.matmul %40, %39, %cst_6 {dimension_numbers = #tpu.dot_dimension_numbers<[1], [0], [0], [1], [0, 0, 1, 1], [], []>} : vector<8x16xbf16>, vector<16x768xbf16>, vector<8x768xf32> -> vector<8x768xf32>
    %42 = vector.extract_strided_slice %41 {offsets = [0, 0], sizes = [8, 256], strides = [1, 1]} : vector<8x768xf32> to vector<8x256xf32>
    %43 = vector.extract_strided_slice %41 {offsets = [0, 256], sizes = [8, 256], strides = [1, 1]} : vector<8x768xf32> to vector<8x256xf32>
    %44 = arith.addf %42, %43 : vector<8x256xf32>
    %45 = vector.extract_strided_slice %41 {offsets = [0, 512], sizes = [8, 256], strides = [1, 1]} : vector<8x768xf32> to vector<8x256xf32>
    %46 = arith.addf %44, %45 : vector<8x256xf32>
    %47 = vector.extract_strided_slice %46 {offsets = [0, 0], sizes = [8, 128], strides = [1, 1]} : vector<8x256xf32> to vector<8x128xf32>
    %48 = vector.extract_strided_slice %46 {offsets = [0, 128], sizes = [8, 128], strides = [1, 1]} : vector<8x256xf32> to vector<8x128xf32>
    %49 = tpu.reciprocal %48 : vector<8x128xf32> -> vector<8x128xf32>
    %50 = arith.mulf %47, %49 : vector<8x128xf32>
    %c0_7 = arith.constant 0 : index
    %c0_8 = arith.constant 0 : index
    %51 = vector.load %arg4[%c0_7, %c0_8] : memref<8x128xf32, #tpu.memory_space<vmem>>, vector<8x128xf32>
    tpu.vector_store %arg4[%c0_7, %c0_8], %50 {strides = array<i32>} : memref<8x128xf32, #tpu.memory_space<vmem>>, vector<8x128xf32>,
    return
  }
  func.func @transform_0(%arg0: i32) -> (i32, i32) {
    %c0_i32 = arith.constant 0 : i32
    %c0_i32_0 = arith.constant 0 : i32
    return %arg0, %c0_i32 : i32, i32
  }
  func.func @transform_1(%arg0: i32) -> (i32, i32) {
    %c0_i32 = arith.constant 0 : i32
    %c0_i32_0 = arith.constant 0 : i32
    %c0_i32_1 = arith.constant 0 : i32
    return %c0_i32, %c0_i32_0 : i32, i32
  }
  func.func @transform_2(%arg0: i32) -> (i32, i32) {
    %c0_i32 = arith.constant 0 : i32
    %c0_i32_0 = arith.constant 0 : i32
    %c0_i32_1 = arith.constant 0 : i32
    return %c0_i32, %c0_i32_0 : i32, i32
  }
  func.func @transform_3(%arg0: i32) -> (i32, i32) {
    %c0_i32 = arith.constant 0 : i32
    %c0_i32_0 = arith.constant 0 : i32
    return %arg0, %c0_i32 : i32, i32
  }
}

</mosaic_0001>

<llo_original>
// kernel: softpool2d_forward.1
$region0: #{softpool2d_forward.1}
  #allocation0 [shape = 'u32[]', space=smem, size = 0x4, offset = 0x4, fixed_abs, tag = 'smem constant byte address 0x4 - core index']
  #allocation1 [shape = 'u32[144,128]{1,0:T(1,128)}', space=vmem, size = 0x12000, scoped, tag = 'internal scratch']
  %s0 = inlined_call_operand.vmem [shape: f32[32,256], index: 0, kind: input, shape index: {}]
  %s1 = inlined_call_operand.vmem [shape: bf16[128,64], index: 1, kind: input, shape index: {}]
  %s2 = inlined_call_operand.vmem [shape: bf16[8,16], index: 2, kind: input, shape index: {}]
  %s3 = inlined_call_operand.vmem [shape: f32[16,128], index: 3, kind: output, shape index: {}]
  %s4 = sld [smem:[#allocation0]]
  $region45: #{softpool2d_forward.1} parent=0
    _
  %s6 = ssub.s32 1, %s4
  %s7 = scalar_select 0, %s6, %s4
  loop: start=0, step=1, limit=4
  $region2: #{softpool2d_forward.1} parent=0 // loop_pre_header
    _
  $region3: #{softpool2d_forward.1} parent=0 // loop_header
    %s9 = sphi 0, %s13
    %p10 = scmp.ge.s32.totalorder %s9, 4
    %s19 = sphi 0, %s21
    %s22 = sphi 0, %s19
    %s23 = sphi 0, %s22
    %s39 = sphi 0, %s23
    %s43 = sphi 0, %s43
    %s45 = sphi 0, %s43
    %s46 = sphi 0, %s45
    %s60 = sphi 0, %s46
    %s64 = sphi 0, %s64
    %s66 = sphi 0, %s64
    %s67 = sphi 0, %s66
    %s81 = sphi 0, %s67
    %s87 = sphi 0, %s89
    %s90 = sphi 0, %s87
    %s91 = sphi 0, %s90
    %s107 = sphi 0, %s91
  $region4: #{softpool2d_forward.1} parent=0 // loop_header_branch
    %12 = sbr.rel (%p10) target = $region8
  $region5: #{softpool2d_forward.1} parent=0 // loop_body
    %s14 = ssub.s32 %s9, 1
    %s15 = ssub.s32 %s9, 2
    %s16 = sadd.s32 %s9, 1
    %s17 = ssub.s32 %s9, %s16
    %p18 = scmp.eq.s32.totalorder %s17, 0
    %s20 = sadd.s32 %s19, 1
    %s21 = scalar_select %p18, %s19, %s20
    %p24 = pneg %p18
    %p25 = scmp.eq.s32.totalorder %s9, 1
    %p26 = por %p24, %p25
    %p27 = scmp.ne.s32.totalorder %s19, %s22
    %p28 = scmp.eq.s32.totalorder %s9, 0
    %p29 = por %p27, %p28
    %p30 = scmp.ne.s32.totalorder %s19, %s22
    %p31 = scmp.eq.s32.totalorder %s14, 1
    %p32 = por %p30, %p31
    %p33 = scmp.ne.s32.totalorder %s22, %s23
    %p34 = scmp.eq.s32.totalorder %s14, 0
    %p35 = por %p33, %p34
    %p36 = scmp.ne.s32.totalorder %s22, %s23
    %p37 = scmp.eq.s32.totalorder %s15, 1
    %p38 = por %p36, %p37
    %p40 = scmp.ne.s32.totalorder %s23, %s39
    %p41 = scmp.eq.s32.totalorder %s15, 0
    %p42 = por %p40, %p41
    %s44 = sadd.s32 %s43, 1
    %p47 = scmp.eq.s32.totalorder %s9, 1
    %p48 = scmp.ne.s32.totalorder %s43, %s45
    %p49 = scmp.eq.s32.totalorder %s9, 0
    %p50 = por %p48, %p49
    %p51 = scmp.ne.s32.totalorder %s43, %s45
    %p52 = scmp.eq.s32.totalorder %s14, 1
    %p53 = por %p51, %p52
    %p54 = scmp.ne.s32.totalorder %s45, %s46
    %p55 = scmp.eq.s32.totalorder %s14, 0
    %p56 = por %p54, %p55
    %p57 = scmp.ne.s32.totalorder %s45, %s46
    %p58 = scmp.eq.s32.totalorder %s15, 1
    %p59 = por %p57, %p58
    %p61 = scmp.ne.s32.totalorder %s46, %s60
    %p62 = scmp.eq.s32.totalorder %s15, 0
    %p63 = por %p61, %p62
    %s65 = sadd.s32 %s64, 1
    %p68 = scmp.eq.s32.totalorder %s9, 1
    %p69 = scmp.ne.s32.totalorder %s64, %s66
    %p70 = scmp.eq.s32.totalorder %s9, 0
    %p71 = por %p69, %p70
    %p72 = scmp.ne.s32.totalorder %s64, %s66
    %p73 = scmp.eq.s32.totalorder %s14, 1
    %p74 = por %p72, %p73
    %p75 = scmp.ne.s32.totalorder %s66, %s67
    %p76 = scmp.eq.s32.totalorder %s14, 0
    %p77 = por %p75, %p76
    %p78 = scmp.ne.s32.totalorder %s66, %s67
    %p79 = scmp.eq.s32.totalorder %s15, 1
    %p80 = por %p78, %p79
    %p82 = scmp.ne.s32.totalorder %s67, %s81
    %p83 = scmp.eq.s32.totalorder %s15, 0
    %p84 = por %p82, %p83
    %s85 = ssub.s32 %s9, %s16
    %p86 = scmp.eq.s32.totalorder %s85, 0
    %s88 = sadd.s32 %s87, 1
    %s89 = scalar_select %p86, %s87, %s88
    %p92 = pneg %p86
    %p93 = scmp.eq.s32.totalorder %s9, 1
    %p94 = por %p92, %p93
    %p95 = scmp.ne.s32.totalorder %s87, %s90
    %p96 = scmp.eq.s32.totalorder %s9, 0
    %p97 = por %p95, %p96
    %p98 = scmp.ne.s32.totalorder %s87, %s90
    %p99 = scmp.eq.s32.totalorder %s14, 1
    %p100 = por %p98, %p99
    %p101 = scmp.ne.s32.totalorder %s90, %s91
    %p102 = scmp.eq.s32.totalorder %s14, 0
    %p103 = por %p101, %p102
    %p104 = scmp.ne.s32.totalorder %s90, %s91
    %p105 = scmp.eq.s32.totalorder %s15, 1
    %p106 = por %p104, %p105
    %p108 = scmp.ne.s32.totalorder %s91, %s107
    %p109 = scmp.eq.s32.totalorder %s15, 0
    %p110 = por %p108, %p109
    %p111 = scmp.le.s32.totalorder 1, %s9
    %p112 = scmp.lt.s32.totalorder %s9, 3
    %p113 = pnand %p111, %p112
    %p114 = pneg %p113
    // Predicated region
    $region9: #{softpool2d_forward.1} parent=5 // pred_check
      _
    $region10: #{softpool2d_forward.1} parent=5 // pred_check_branch
      %116 = sbr.rel (%p113) target = $region12
    $region11: #{softpool2d_forward.1} parent=5 // pred_region
      %s117 = ssub.s32 %s9, 1
      // Predicated region
      $region13: #{softpool2d_forward.1} parent=11 // pred_check
        %p118 = pneg %p56
      $region14: #{softpool2d_forward.1} parent=11 // pred_check_branch
        %120 = sbr.rel (%p118) target = $region16
      $region15: #{softpool2d_forward.1} parent=11 // pred_region
        _
      $region16: #{softpool2d_forward.1} parent=11 // pred_fallthru
        _
      // Predicated region
      $region17: #{softpool2d_forward.1} parent=11 // pred_check
        %p121 = pneg %p77
      $region18: #{softpool2d_forward.1} parent=11 // pred_check_branch
        %123 = sbr.rel (%p121) target = $region20
      $region19: #{softpool2d_forward.1} parent=11 // pred_region
        _
      $region20: #{softpool2d_forward.1} parent=11 // pred_fallthru
        _
    $region12: #{softpool2d_forward.1} parent=5 // pred_fallthru
      _
    %p124 = scmp.lt.s32.totalorder %s9, 2
    // Predicated region
    $region21: #{softpool2d_forward.1} parent=5 // pred_check
      %p125 = pneg %p124
    $region22: #{softpool2d_forward.1} parent=5 // pred_check_branch
      %127 = sbr.rel (%p125) target = $region24
    $region23: #{softpool2d_forward.1} parent=5 // pred_region
      // Predicated region
      $region25: #{softpool2d_forward.1} parent=23 // pred_check
        %p128 = pneg %p29
      $region26: #{softpool2d_forward.1} parent=23 // pred_check_branch
        %130 = sbr.rel (%p128) target = $region28
      $region27: #{softpool2d_forward.1} parent=23 // pred_region
        %s131 = smul.u32 2, %s9
        %p132 = scmp.lt.s32.totalorder %s131, 3
        %s133 = scalar_select %p132, %s131, 3
        %s134 = smul.addr %s133, 2
        %s135 = smul.addr %s134, 8
        %s136 = scalar_lea.vmem %s0, %s135
        %s137 = smul.u32 2, %s9
      $region28: #{softpool2d_forward.1} parent=23 // pred_fallthru
        _
    $region24: #{softpool2d_forward.1} parent=5 // pred_fallthru
      _
    %p138 = scmp.le.s32.totalorder 1, %s9
    %p139 = scmp.lt.s32.totalorder %s9, 3
    %p140 = pnand %p138, %p139
    %p141 = pneg %p140
    // Predicated region
    $region29: #{softpool2d_forward.1} parent=5 // pred_check
      _
    $region30: #{softpool2d_forward.1} parent=5 // pred_check_branch
      %143 = sbr.rel (%p140) target = $region32
    $region31: #{softpool2d_forward.1} parent=5 // pred_region
      %s144 = ssub.s32 %s9, 1
      %s145 = smul.u32 2, %s14
      %p146 = scmp.lt.s32.totalorder %s145, 3
      %s147 = scalar_select %p146, %s145, 3
      %s148 = smul.addr %s147, 2
      %s149 = smul.addr %s148, 8
      %s150 = scalar_lea.vmem %s0, %s149
      %p151 = pneg %p35
      %p152 = pneg %p32
      %p153 = pneg %p56
      %p154 = pneg %p53
      %p155 = pneg %p77
      %p156 = pneg %p74
      %p157 = pneg %p103
      %p158 = pneg %p100
      %p159 = scmp.lt.s32.totalorder %s14, 1
      %s160 = scalar_select %p159, %s14, 1
      %s161 = smul.addr %s160, 8
      %s162 = scalar_lea.vmem %s3, %s161
      %s163 = smul.u32 2, %s14
      %p164 = scmp.lt.s32.totalorder %s163, 3
      %s165 = scalar_select %p164, %s163, 3
      %s166 = smul.addr %s165, 2
      %s167 = smul.addr %s166, 8
      %s168 = scalar_lea.vmem %s0, %s167
      %s169 = smul.u32 2, %s14
      %p170 = scmp.lt.s32.totalorder %s14, 1
      %s171 = scalar_select %p170, %s14, 1
      %s172 = smul.addr %s171, 8
      %s173 = scalar_lea.vmem %s3, %s172
      %v175 = vld [vmem:[%s168] sm:$0xff]
      %v176 = vld [vmem:[%s168 + $0x8] sm:$0xff]
      %v177 = vld [vmem:[%s168 + $0x10] sm:$0xff]
      %v178 = vld [vmem:[%s168 + $0x18] sm:$0xff]
      %v179 = vmul.f32 %v175, 1.442695
      %v180 = vpow.pop %v179
      %v181 = vmul.f32 %v176, 1.442695
      %v182 = vpow.pop %v181
      %v183 = vmul.f32 %v177, 1.442695
      %v184 = vpow.pop %v183
      %v185 = vmul.f32 %v178, 1.442695
      %v186 = vpow.pop %v185
      %v187 = vmul.f32 %v180, %v175
      %v188 = vmul.f32 %v182, %v176
      %v189 = vmul.f32 %v184, %v177
      %v190 = vmul.f32 %v186, %v178
      %v191 = vpack.c.bf16 %v189, %v187
      %v192 = vpack.c.bf16 %v190, %v188
      %v193 = vpack.c.bf16 %v184, %v180
      %v194 = vpack.c.bf16 %v186, %v182
      %v195 = vunpack.c.l.bf16 %v191
      %v196 = vunpack.c.l.bf16 %v192
      %v197 = vunpack.c.h.bf16 %v191
      %v198 = vunpack.c.h.bf16 %v192
      %v199 = vunpack.c.l.bf16 %v193
      %v200 = vunpack.c.l.bf16 %v194
      %v201 = vunpack.c.h.bf16 %v193
      %v202 = vunpack.c.h.bf16 %v194
      %v203 = vsub.f32 %v187, %v195
      %v204 = vsub.f32 %v188, %v196
      %v205 = vsub.f32 %v189, %v197
      %v206 = vsub.f32 %v190, %v198
      %v207 = vsub.f32 %v180, %v199
      %v208 = vsub.f32 %v182, %v200
      %v209 = vsub.f32 %v184, %v201
      %v210 = vsub.f32 %v186, %v202
      %v211 = vpack.c.bf16 %v205, %v203
      %v212 = vpack.c.bf16 %v206, %v204
      %v213 = vpack.c.bf16 %v209, %v207
      %v214 = vpack.c.bf16 %v210, %v208
      %v215 = vunpack.c.l.bf16 %v211
      %v216 = vunpack.c.l.bf16 %v212
      %v217 = vunpack.c.h.bf16 %v211
      %v218 = vunpack.c.h.bf16 %v212
      %v219 = vunpack.c.l.bf16 %v213
      %v220 = vunpack.c.l.bf16 %v214
      %v221 = vunpack.c.h.bf16 %v213
      %v222 = vunpack.c.h.bf16 %v214
      %v223 = vsub.f32 %v203, %v215
      %v224 = vsub.f32 %v204, %v216
      %v225 = vsub.f32 %v205, %v217
      %v226 = vsub.f32 %v206, %v218
      %v227 = vsub.f32 %v207, %v219
      %v228 = vsub.f32 %v208, %v220
      %v229 = vsub.f32 %v209, %v221
      %v230 = vsub.f32 %v210, %v222
      %v231 = vpack.c.bf16 %v225, %v223
      %v232 = vpack.c.bf16 %v226, %v224
      %v233 = vpack.c.bf16 %v229, %v227
      %v234 = vpack.c.bf16 %v230, %v228
      %v235 = vld [vmem:[%s1] sm:$0xf]
      %v236 = vld [vmem:[%s1 + $0x4] sm:$0xf]
      %v237 = vld [vmem:[%s1 + $0x8] sm:$0xf]
      %v238 = vld [vmem:[%s1 + $0xc] sm:$0xf]
      %v239 = vld [vmem:[%s1 + $0x10] sm:$0xf]
      %v240 = vld [vmem:[%s1 + $0x14] sm:$0xf]
      %v241 = vld [vmem:[%s1 + $0x18] sm:$0xf]
      %v242 = vld [vmem:[%s1 + $0x1c] sm:$0xf]
      %v243 = vld [vmem:[%s1 + $0x20] sm:$0xf]
      %v244 = vld [vmem:[%s1 + $0x24] sm:$0xf]
      %v245 = vld [vmem:[%s1 + $0x28] sm:$0xf]
      %v246 = vld [vmem:[%s1 + $0x2c] sm:$0xf]
      %v247 = vld [vmem:[%s1 + $0x30] sm:$0xf]
      %v248 = vld [vmem:[%s1 + $0x34] sm:$0xf]
      %v249 = vld [vmem:[%s1 + $0x38] sm:$0xf]
      %v250 = vld [vmem:[%s1 + $0x3c] sm:$0xf]
      %v267 = vunpack.c.l.b16 %v235
      %v268 = vunpack.c.l.b16 %v236
      %v269 = vunpack.c.l.b16 %v237
      %v270 = vunpack.c.l.b16 %v238
      %v271 = vunpack.c.l.b16 %v239
      %v272 = vunpack.c.l.b16 %v240
      %v273 = vunpack.c.l.b16 %v241
      %v274 = vunpack.c.l.b16 %v242
      %v275 = vunpack.c.l.b16 %v243
      %v276 = vunpack.c.l.b16 %v244
      %v277 = vunpack.c.l.b16 %v245
      %v278 = vunpack.c.l.b16 %v246
      %v279 = vunpack.c.l.b16 %v247
      %v280 = vunpack.c.l.b16 %v248
      %v281 = vunpack.c.l.b16 %v249
      %v282 = vunpack.c.l.b16 %v250
      %v283 = vpack.c.b16 %v268, %v267
      %v284 = vpack.c.b16 %v270, %v269
      %v285 = vpack.c.b16 %v272, %v271
      %v286 = vpack.c.b16 %v274, %v273
      %v287 = vpack.c.b16 %v276, %v275
      %v288 = vpack.c.b16 %v278, %v277
      %v289 = vpack.c.b16 %v280, %v279
      %v290 = vpack.c.b16 %v282, %v281
      %299 = vmatprep.subr.bf16.mxu0 0
      %300 = vmatpush1.bf16.msra.mxu0 %v283
      %301 = vmatprep.subr.bf16.mxu0 0
      %302 = vmatpush1.bf16.msra.mxu0 %v284
      %303 = vmatprep.subr.bf16.mxu0 0
      %304 = vmatpush1.bf16.msra.mxu0 %v285
      %305 = vmatprep.subr.bf16.mxu0 0
      %306 = vmatpush1.bf16.msra.mxu0 %v286
      %307 = vmatprep.subr.bf16.mxu0 0
      %308 = vmatpush1.bf16.msra.mxu0 %v287
      %309 = vmatprep.subr.bf16.mxu0 0
      %310 = vmatpush1.bf16.msra.mxu0 %v288
      %311 = vmatprep.subr.bf16.mxu0 0
      %312 = vmatpush1.bf16.msra.mxu0 %v289
      %313 = vmatprep.subr.bf16.mxu0 0
      %314 = vmatpush1.bf16.msra.mxu0 %v290
      %315 = vmatprep.subr.bf16.mxu0 0
      %316 = vmatpush1.bf16.msra.mxu0 0
      %317 = vmatprep.subr.bf16.mxu0 0
      %318 = vmatpush1.bf16.msra.mxu0 0
      %319 = vmatprep.subr.bf16.mxu0 0
      %320 = vmatpush1.bf16.msra.mxu0 0
      %321 = vmatprep.subr.bf16.mxu0 0
      %322 = vmatpush1.bf16.msra.mxu0 0
      %323 = vmatprep.subr.bf16.mxu0 0
      %324 = vmatpush1.bf16.msra.mxu0 0
      %325 = vmatprep.subr.bf16.mxu0 0
      %326 = vmatpush1.bf16.msra.mxu0 0
      %327 = vmatprep.subr.bf16.mxu0 0
      %328 = vmatpush1.bf16.msra.mxu0 0
      %329 = vmatprep.subr.bf16.mxu0 0
      %330 = vmatpush1.bf16.msra.mxu0 0
      %331 = vmatprep.mubr.bf16.mxu0 0
      %332 = vmatmul.mubr.bf16.gmra.mrb[0].mxu0 %v191
      %v333 = vpop.f32.mrb[0].mxu0
      %v334 = vadd.f32 0.0, %v333
      %v335 = vpop.f32.mrb[0].mxu0
      %v336 = vpop.f32.mrb[0].mxu0
      %v337 = vadd.f32 0.0, %v336
      %v338 = vpop.f32.mrb[0].mxu0
      %339 = vmatprep.mubr.bf16.mxu0 0
      %340 = vmatmul.mubr.bf16.gmra.mrb[0].mxu0 %v193
      %v341 = vpop.f32.mrb[0].mxu0
      %v342 = vadd.f32 0.0, %v341
      %v343 = vpop.f32.mrb[0].mxu0
      %v344 = vpop.f32.mrb[0].mxu0
      %v345 = vadd.f32 0.0, %v344
      %v346 = vpop.f32.mrb[0].mxu0
      %347 = vmatprep.mubr.bf16.mxu0 0
      %348 = vmatmul.mubr.bf16.gmra.mrb[0].mxu0 %v211
      %v349 = vpop.f32.mrb[0].mxu0
      %v350 = vadd.f32 0.0, %v349
      %v351 = vpop.f32.mrb[0].mxu0
      %v352 = vpop.f32.mrb[0].mxu0
      %v353 = vadd.f32 0.0, %v352
      %v354 = vpop.f32.mrb[0].mxu0
      %355 = vmatprep.mubr.bf16.mxu0 0
      %356 = vmatmul.mubr.bf16.gmra.mrb[0].mxu0 %v213
      %v357 = vpop.f32.mrb[0].mxu0
      %v358 = vadd.f32 0.0, %v357
      %v359 = vpop.f32.mrb[0].mxu0
      %v360 = vpop.f32.mrb[0].mxu0
      %v361 = vadd.f32 0.0, %v360
      %v362 = vpop.f32.mrb[0].mxu0
      %363 = vmatprep.mubr.bf16.mxu0 0
      %364 = vmatmul.mubr.bf16.gmra.mrb[0].mxu0 %v231
      %v365 = vpop.f32.mrb[0].mxu0
      %v366 = vadd.f32 0.0, %v365
      %v367 = vpop.f32.mrb[0].mxu0
      %v368 = vpop.f32.mrb[0].mxu0
      %v369 = vadd.f32 0.0, %v368
      %v370 = vpop.f32.mrb[0].mxu0
      %371 = vmatprep.mubr.bf16.mxu0 0
      %372 = vmatmul.mubr.bf16.gmra.mrb[0].mxu0 %v233
      %v373 = vpop.f32.mrb[0].mxu0
      %v374 = vadd.f32 0.0, %v373
      %v375 = vpop.f32.mrb[0].mxu0
      %v376 = vpop.f32.mrb[0].mxu0
      %v377 = vadd.f32 0.0, %v376
      %v378 = vpop.f32.mrb[0].mxu0
      %379 = vdwg.mxu0
      %v380 = vadd.f32 %v334, %v350
      %v381 = vadd.f32 %v337, %v353
      %v382 = vadd.f32 %v342, %v358
      %v383 = vadd.f32 %v345, %v361
      %v384 = vadd.f32 %v380, %v366
      %v385 = vadd.f32 %v381, %v369
      %v386 = vadd.f32 %v382, %v374
      %v387 = vadd.f32 %v383, %v377
      %388 = vmatprep.subr.bf16.mxu0 0
      %389 = vmatpush1.bf16.msra.mxu0 %v283
      %390 = vmatprep.subr.bf16.mxu0 0
      %391 = vmatpush1.bf16.msra.mxu0 %v284
      %392 = vmatprep.subr.bf16.mxu0 0
      %393 = vmatpush1.bf16.msra.mxu0 %v285
      %394 = vmatprep.subr.bf16.mxu0 0
      %395 = vmatpush1.bf16.msra.mxu0 %v286
      %396 = vmatprep.subr.bf16.mxu0 0
      %397 = vmatpush1.bf16.msra.mxu0 %v287
      %398 = vmatprep.subr.bf16.mxu0 0
      %399 = vmatpush1.bf16.msra.mxu0 %v288
      %400 = vmatprep.subr.bf16.mxu0 0
      %401 = vmatpush1.bf16.msra.mxu0 %v289
      %402 = vmatprep.subr.bf16.mxu0 0
      %403 = vmatpush1.bf16.msra.mxu0 %v290
      %404 = vmatprep.subr.bf16.mxu0 0
      %405 = vmatpush1.bf16.msra.mxu0 0
      %406 = vmatprep.subr.bf16.mxu0 0
      %407 = vmatpush1.bf16.msra.mxu0 0
      %408 = vmatprep.subr.bf16.mxu0 0
      %409 = vmatpush1.bf16.msra.mxu0 0
      %410 = vmatprep.subr.bf16.mxu0 0
      %411 = vmatpush1.bf16.msra.mxu0 0
      %412 = vmatprep.subr.bf16.mxu0 0
      %413 = vmatpush1.bf16.msra.mxu0 0
      %414 = vmatprep.subr.bf16.mxu0 0
      %415 = vmatpush1.bf16.msra.mxu0 0
      %416 = vmatprep.subr.bf16.mxu0 0
      %417 = vmatpush1.bf16.msra.mxu0 0
      %418 = vmatprep.subr.bf16.mxu0 0
      %419 = vmatpush1.bf16.msra.mxu0 0
      %420 = vmatprep.mubr.bf16.mxu0 0
      %421 = vmatmul.mubr.bf16.gmra.mrb[0].mxu0 %v192
      %v422 = vpop.f32.mrb[0].mxu0
      %v423 = vadd.f32 0.0, %v422
      %v424 = vpop.f32.mrb[0].mxu0
      %v425 = vpop.f32.mrb[0].mxu0
      %v426 = vadd.f32 0.0, %v425
      %v427 = vpop.f32.mrb[0].mxu0
      %428 = vmatprep.mubr.bf16.mxu0 0
      %429 = vmatmul.mubr.bf16.gmra.mrb[0].mxu0 %v194
      %v430 = vpop.f32.mrb[0].mxu0
      %v431 = vadd.f32 0.0, %v430
      %v432 = vpop.f32.mrb[0].mxu0
      %v433 = vpop.f32.mrb[0].mxu0
      %v434 = vadd.f32 0.0, %v433
      %v435 = vpop.f32.mrb[0].mxu0
      %436 = vmatprep.mubr.bf16.mxu0 0
      %437 = vmatmul.mubr.bf16.gmra.mrb[0].mxu0 %v212
      %v438 = vpop.f32.mrb[0].mxu0
      %v439 = vadd.f32 0.0, %v438
      %v440 = vpop.f32.mrb[0].mxu0
      %v441 = vpop.f32.mrb[0].mxu0
      %v442 = vadd.f32 0.0, %v441
      %v443 = vpop.f32.mrb[0].mxu0
      %444 = vmatprep.mubr.bf16.mxu0 0
      %445 = vmatmul.mubr.bf16.gmra.mrb[0].mxu0 %v214
      %v446 = vpop.f32.mrb[0].mxu0
      %v447 = vadd.f32 0.0, %v446
      %v448 = vpop.f32.mrb[0].mxu0
      %v449 = vpop.f32.mrb[0].mxu0
      %v450 = vadd.f32 0.0, %v449
      %v451 = vpop.f32.mrb[0].mxu0
      %452 = vmatprep.mubr.bf16.mxu0 0
      %453 = vmatmul.mubr.bf16.gmra.mrb[0].mxu0 %v232
      %v454 = vpop.f32.mrb[0].mxu0
      %v455 = vadd.f32 0.0, %v454
      %v456 = vpop.f32.mrb[0].mxu0
      %v457 = vpop.f32.mrb[0].mxu0
      %v458 = vadd.f32 0.0, %v457
      %v459 = vpop.f32.mrb[0].mxu0
      %460 = vmatprep.mubr.bf16.mxu0 0
      %461 = vmatmul.mubr.bf16.gmra.mrb[0].mxu0 %v234
      %v462 = vpop.f32.mrb[0].mxu0
      %v463 = vadd.f32 0.0, %v462
      %v464 = vpop.f32.mrb[0].mxu0
      %v465 = vpop.f32.mrb[0].mxu0
      %v466 = vadd.f32 0.0, %v465
      %v467 = vpop.f32.mrb[0].mxu0
      %468 = vdwg.mxu0
      %v469 = vadd.f32 %v423, %v439
      %v470 = vadd.f32 %v426, %v442
      %v471 = vadd.f32 %v431, %v447
      %v472 = vadd.f32 %v434, %v450
      %v473 = vadd.f32 %v469, %v455
      %v474 = vadd.f32 %v470, %v458
      %v475 = vadd.f32 %v471, %v463
      %v476 = vadd.f32 %v472, %v466
      %479 = vrot.lane.b32.xlu0 %v473, 64
      %v480 = vpop.permute.xlu0 %479
      %481 = vrot.lane.b32.xlu0 %v474, 64
      %v482 = vpop.permute.xlu0 %481
      %487 = vrot.lane.b32.xlu0 %v475, 64
      %v488 = vpop.permute.xlu0 %487
      %489 = vrot.lane.b32.xlu0 %v476, 64
      %v490 = vpop.permute.xlu0 %489
      %vm493 = vcmask 523264
      %v494 = vsel %vm493, %v384, %v480
      %v495 = vsel %vm493, %v385, %v482
      %v496 = vsel %vm493, %v386, %v488
      %v497 = vsel %vm493, %v387, %v490
      %v498 = vpack.c.bf16 %v495, %v494
      %v499 = vpack.c.bf16 %v497, %v496
      %v500 = vunpack.c.l.bf16 %v498
      %v501 = vunpack.c.l.bf16 %v499
      %v502 = vunpack.c.h.bf16 %v498
      %v503 = vunpack.c.h.bf16 %v499
      %v504 = vsub.f32 %v494, %v500
      %v505 = vsub.f32 %v496, %v501
      %v506 = vsub.f32 %v495, %v502
      %v507 = vsub.f32 %v497, %v503
      %v508 = vpack.c.bf16 %v506, %v504
      %v509 = vpack.c.bf16 %v507, %v505
      %v510 = vunpack.c.l.bf16 %v508
      %v511 = vunpack.c.l.bf16 %v509
      %v512 = vunpack.c.h.bf16 %v508
      %v513 = vunpack.c.h.bf16 %v509
      %v514 = vsub.f32 %v504, %v510
      %v515 = vsub.f32 %v505, %v511
      %v516 = vsub.f32 %v506, %v512
      %v517 = vsub.f32 %v507, %v513
      %v518 = vpack.c.bf16 %v516, %v514
      %v519 = vpack.c.bf16 %v517, %v515
      %v520 = vld [vmem:[%s2] sm:$0xf]
      %vm521 = vcmask 130048
      %v523 = vsel %vm521, %v520, 0
      %525 = vmatprep.subr.bf16.mxu0 %v499
      %526 = vmatpush1.bf16.msra.mxu0 %v498
      %527 = vmatprep.subr.bf16.mxu0 0
      %528 = vmatpush1.bf16.msra.mxu0 0
      %529 = vmatprep.subr.bf16.mxu0 0
      %530 = vmatpush1.bf16.msra.mxu0 0
      %531 = vmatprep.subr.bf16.mxu0 0
      %532 = vmatpush1.bf16.msra.mxu0 0
      %533 = vmatprep.subr.bf16.mxu0 0
      %534 = vmatpush1.bf16.msra.mxu0 0
      %535 = vmatprep.subr.bf16.mxu0 0
      %536 = vmatpush1.bf16.msra.mxu0 0
      %537 = vmatprep.subr.bf16.mxu0 0
      %538 = vmatpush1.bf16.msra.mxu0 0
      %539 = vmatprep.subr.bf16.mxu0 0
      %540 = vmatpush1.bf16.msra.mxu0 0
      %541 = vmatprep.subr.bf16.mxu0 0
      %542 = vmatpush1.bf16.msra.mxu0 0
      %543 = vmatprep.subr.bf16.mxu0 0
      %544 = vmatpush1.bf16.msra.mxu0 0
      %545 = vmatprep.subr.bf16.mxu0 0
      %546 = vmatpush1.bf16.msra.mxu0 0
      %547 = vmatprep.subr.bf16.mxu0 0
      %548 = vmatpush1.bf16.msra.mxu0 0
      %549 = vmatprep.subr.bf16.mxu0 0
      %550 = vmatpush1.bf16.msra.mxu0 0
      %551 = vmatprep.subr.bf16.mxu0 0
      %552 = vmatpush1.bf16.msra.mxu0 0
      %553 = vmatprep.subr.bf16.mxu0 0
      %554 = vmatpush1.bf16.msra.mxu0 0
      %555 = vmatprep.subr.bf16.mxu0 0
      %556 = vmatpush1.bf16.msra.mxu0 0
      %557 = vmatprep.mubr.bf16.mxu0 0
      %558 = vmatmul.mubr.bf16.gmra.mrb[0].mxu0 %v523
      %v559 = vpop.f32.mrb[0].mxu0
      %v560 = vadd.f32 0.0, %v559
      %v561 = vpop.f32.mrb[0].mxu0
      %v562 = vadd.f32 0.0, %v561
      %v563 = vpop.f32.mrb[0].mxu0
      %v564 = vpop.f32.mrb[0].mxu0
      %565 = vdwg.mxu0
      %566 = vmatprep.subr.bf16.mxu0 %v509
      %567 = vmatpush1.bf16.msra.mxu0 %v508
      %568 = vmatprep.subr.bf16.mxu0 0
      %569 = vmatpush1.bf16.msra.mxu0 0
      %570 = vmatprep.subr.bf16.mxu0 0
      %571 = vmatpush1.bf16.msra.mxu0 0
      %572 = vmatprep.subr.bf16.mxu0 0
      %573 = vmatpush1.bf16.msra.mxu0 0
      %574 = vmatprep.subr.bf16.mxu0 0
      %575 = vmatpush1.bf16.msra.mxu0 0
      %576 = vmatprep.subr.bf16.mxu0 0
      %577 = vmatpush1.bf16.msra.mxu0 0
      %578 = vmatprep.subr.bf16.mxu0 0
      %579 = vmatpush1.bf16.msra.mxu0 0
      %580 = vmatprep.subr.bf16.mxu0 0
      %581 = vmatpush1.bf16.msra.mxu0 0
      %582 = vmatprep.subr.bf16.mxu0 0
      %583 = vmatpush1.bf16.msra.mxu0 0
      %584 = vmatprep.subr.bf16.mxu0 0
      %585 = vmatpush1.bf16.msra.mxu0 0
      %586 = vmatprep.subr.bf16.mxu0 0
      %587 = vmatpush1.bf16.msra.mxu0 0
      %588 = vmatprep.subr.bf16.mxu0 0
      %589 = vmatpush1.bf16.msra.mxu0 0
      %590 = vmatprep.subr.bf16.mxu0 0
      %591 = vmatpush1.bf16.msra.mxu0 0
      %592 = vmatprep.subr.bf16.mxu0 0
      %593 = vmatpush1.bf16.msra.mxu0 0
      %594 = vmatprep.subr.bf16.mxu0 0
      %595 = vmatpush1.bf16.msra.mxu0 0
      %596 = vmatprep.subr.bf16.mxu0 0
      %597 = vmatpush1.bf16.msra.mxu0 0
      %598 = vmatprep.mubr.bf16.mxu0 0
      %599 = vmatmul.mubr.bf16.gmra.mrb[0].mxu0 %v523
      %v600 = vpop.f32.mrb[0].mxu0
      %v601 = vadd.f32 0.0, %v600
      %v602 = vpop.f32.mrb[0].mxu0
      %v603 = vadd.f32 0.0, %v602
      %v604 = vpop.f32.mrb[0].mxu0
      %v605 = vpop.f32.mrb[0].mxu0
      %606 = vdwg.mxu0
      %607 = vmatprep.subr.bf16.mxu0 %v519
      %608 = vmatpush1.bf16.msra.mxu0 %v518
      %609 = vmatprep.subr.bf16.mxu0 0
      %610 = vmatpush1.bf16.msra.mxu0 0
      %611 = vmatprep.subr.bf16.mxu0 0
      %612 = vmatpush1.bf16.msra.mxu0 0
      %613 = vmatprep.subr.bf16.mxu0 0
      %614 = vmatpush1.bf16.msra.mxu0 0
      %615 = vmatprep.subr.bf16.mxu0 0
      %616 = vmatpush1.bf16.msra.mxu0 0
      %617 = vmatprep.subr.bf16.mxu0 0
      %618 = vmatpush1.bf16.msra.mxu0 0
      %619 = vmatprep.subr.bf16.mxu0 0
      %620 = vmatpush1.bf16.msra.mxu0 0
      %621 = vmatprep.subr.bf16.mxu0 0
      %622 = vmatpush1.bf16.msra.mxu0 0
      %623 = vmatprep.subr.bf16.mxu0 0
      %624 = vmatpush1.bf16.msra.mxu0 0
      %625 = vmatprep.subr.bf16.mxu0 0
      %626 = vmatpush1.bf16.msra.mxu0 0
      %627 = vmatprep.subr.bf16.mxu0 0
      %628 = vmatpush1.bf16.msra.mxu0 0
      %629 = vmatprep.subr.bf16.mxu0 0
      %630 = vmatpush1.bf16.msra.mxu0 0
      %631 = vmatprep.subr.bf16.mxu0 0
      %632 = vmatpush1.bf16.msra.mxu0 0
      %633 = vmatprep.subr.bf16.mxu0 0
      %634 = vmatpush1.bf16.msra.mxu0 0
      %635 = vmatprep.subr.bf16.mxu0 0
      %636 = vmatpush1.bf16.msra.mxu0 0
      %637 = vmatprep.subr.bf16.mxu0 0
      %638 = vmatpush1.bf16.msra.mxu0 0
      %639 = vmatprep.mubr.bf16.mxu0 0
      %640 = vmatmul.mubr.bf16.gmra.mrb[0].mxu0 %v523
      %v641 = vpop.f32.mrb[0].mxu0
      %v642 = vadd.f32 0.0, %v641
      %v643 = vpop.f32.mrb[0].mxu0
      %v644 = vadd.f32 0.0, %v643
      %v645 = vpop.f32.mrb[0].mxu0
      %v646 = vpop.f32.mrb[0].mxu0
      %647 = vdwg.mxu0
      %v648 = vadd.f32 %v560, %v601
      %v649 = vadd.f32 %v562, %v603
      %v650 = vadd.f32 %v648, %v642
      %v651 = vadd.f32 %v649, %v644
      %v652 = vrcp.pop %v651
      %v653 = vmul.f32 %v650, %v652
      %654 = vst [vmem:[%s173] sm:$0xff] %v653
      %p655 = scmp.lt.s32.totalorder %s14, 1
      %s656 = scalar_select %p655, %s14, 1
      %s657 = smul.addr %s656, 8
      %s658 = scalar_lea.vmem %s3, %s657
      // Predicated region
      $region33: #{softpool2d_forward.1} parent=31 // pred_check
        %p659 = pneg %p100
      $region34: #{softpool2d_forward.1} parent=31 // pred_check_branch
        %661 = sbr.rel (%p659) target = $region36
      $region35: #{softpool2d_forward.1} parent=31 // pred_region
        _
      $region36: #{softpool2d_forward.1} parent=31 // pred_fallthru
        _
    $region32: #{softpool2d_forward.1} parent=5 // pred_fallthru
      _
    %p662 = scmp.le.s32.totalorder 2, %s9
    // Predicated region
    $region37: #{softpool2d_forward.1} parent=5 // pred_check
      %p663 = pneg %p662
    $region38: #{softpool2d_forward.1} parent=5 // pred_check_branch
      %665 = sbr.rel (%p663) target = $region40
    $region39: #{softpool2d_forward.1} parent=5 // pred_region
      %s666 = ssub.s32 %s9, 2
      // Predicated region
      $region41: #{softpool2d_forward.1} parent=39 // pred_check
        %p667 = pneg %p106
      $region42: #{softpool2d_forward.1} parent=39 // pred_check_branch
        %669 = sbr.rel (%p667) target = $region44
      $region43: #{softpool2d_forward.1} parent=39 // pred_region
        %p670 = scmp.lt.s32.totalorder %s15, 1
        %s671 = scalar_select %p670, %s15, 1
        %s672 = smul.addr %s671, 8
        %s673 = scalar_lea.vmem %s3, %s672
      $region44: #{softpool2d_forward.1} parent=39 // pred_fallthru
        _
    $region40: #{softpool2d_forward.1} parent=5 // pred_fallthru
      _
  $region6: #{softpool2d_forward.1} parent=0 // loop_footer
    %s13 = sadd.s32 1, %s9
  $region7: #{softpool2d_forward.1} parent=0 // loop_footer_branch
    %8 = sbr.rel target = $region3
  $region8: #{softpool2d_forward.1} parent=0 // loop_exit
    _

</llo_original>
